<compile_context>
chip_gen: v7x
topology: tpu7x:2x2x1
jax: 0.10.0
libtpu: 0.0.40
codegen_flags: <defaults>
</compile_context>

<pallas_src>
import functools

import jax
import jax.numpy as jnp
from jax.experimental import pallas as pl
from jax.experimental.pallas import tpu as pltpu


def end_deconv_kernel(xp_ref, w_ref, g_ref, gamma_ref, beta_ref, a_ref,
                      o_ref, s1_ref, s2_ref, *, inv_count):
    # xp_ref   : (1, Hp, Wp*Cin)      padded, lane-dense input rows for batch b
    # w_ref    : (K, Wp*Cin, W*Cout)  banded (block-Toeplitz) conv weight
    # g_ref    : (W*Cout, W*Cout)     channel-group sum-and-broadcast matrix
    # gamma_ref/beta_ref : (1, W*Cout) BN affine params tiled over W
    # a_ref    : (1, 1)               shared PReLU slope
    # o_ref    : (1, H, W*Cout)       output slab for batch b
    # s1_ref/s2_ref : (1, W*Cout)     running sum / sum-of-squares (VMEM scratch)
    phase = pl.program_id(0)
    b = pl.program_id(1)

    K = w_ref.shape[0]
    H = o_ref.shape[1]
    WC = o_ref.shape[2]

    # --- deconv (== conv with flipped kernel) as K banded GEMMs on the MXU ---
    acc = jnp.zeros((H, WC), jnp.float32)
    for kh in range(K):  # static unroll, 3 matmuls with K-dim = Wp*Cin
        acc = acc + jnp.dot(xp_ref[0, kh:kh + H, :], w_ref[kh],
                            preferred_element_type=jnp.float32)

    @pl.when((phase == 0) & (b == 0))
    def _init():
        s1_ref[...] = jnp.zeros_like(s1_ref)
        s2_ref[...] = jnp.zeros_like(s2_ref)

    @pl.when(phase == 0)
    def _accumulate_stats():
        s1_ref[...] += jnp.sum(acc, axis=0, keepdims=True)
        s2_ref[...] += jnp.sum(acc * acc, axis=0, keepdims=True)
        # defined placeholder write; fully overwritten in phase 1
        o_ref[0] = acc.astype(o_ref.dtype)

    @pl.when(phase == 1)
    def _normalize_and_store():
        # per-channel mean / E[x^2], broadcast back to every (w, c) lane via one
        # tiny matmul (replaces cross-lane reductions).
        mean_v = jnp.dot(s1_ref[...], g_ref[...],
                         preferred_element_type=jnp.float32) * inv_count
        ex2_v = jnp.dot(s2_ref[...], g_ref[...],
                        preferred_element_type=jnp.float32) * inv_count
        var_v = ex2_v - mean_v * mean_v
        inv_v = jax.lax.rsqrt(var_v + 1e-5)
        scale = gamma_ref[...] * inv_v
        shift = beta_ref[...] - mean_v * scale
        y = acc * scale + shift
        y = jnp.where(y > 0, y, y * a_ref[...])          # PReLU (shared slope)
        o_ref[0] = y.astype(o_ref.dtype)


def end_deconv_pallas(x_nchw, wt, gamma, beta, prelu_a):
    """x_nchw: (N, Cin, H, W); wt: ConvTranspose2d weight (Cin, Cout, K, K)."""
    N, Cin, H, W = x_nchw.shape
    Cout = wt.shape[1]
    K = wt.shape[2]
    pad = 1                     # module's ConvTranspose2d padding
    padc = K - 1 - pad          # equivalent forward-conv padding (= 1 here)
    Hp, Wp = H + 2 * padc, W + 2 * padc
    WC = W * Cout

    # NCHW -> padded lane-dense (N, Hp, Wp*Cin).
    # TODO(synk): if the producer can emit NHWC activations (or consume the
    # (N, H, W*Cout) slab directly), this transpose/pad and the final transpose
    # disappear entirely; allow_input_fusion lets XLA fuse them into the call.
    x = jnp.transpose(x_nchw, (0, 2, 3, 1)).astype(jnp.float32)
    xp = jnp.pad(x, ((0, 0), (padc, padc), (padc, padc), (0, 0)))
    xp = xp.reshape(N, Hp, Wp * Cin)

    # ConvTranspose2d(stride=1) == conv with spatially flipped kernel:
    # w_flip[kh, kw, ci, co] = wt[ci, co, K-1-kh, K-1-kw]
    w_flip = jnp.transpose(jnp.flip(wt, axis=(2, 3)), (2, 3, 0, 1)).astype(jnp.float32)

    # Banded GEMM weight: w_big[kh, (w+kw)*Cin+ci, w*Cout+co] = w_flip[kh, kw, ci, co]
    taps = (jnp.arange(W)[:, None, None] + jnp.arange(K)[None, :, None]
            == jnp.arange(Wp)[None, None, :]).astype(jnp.float32)         # (W, K, Wp)
    w_big = jnp.einsum('wkp,hkcd->hpcwd', taps, w_flip).reshape(K, Wp * Cin, WC)

    # Channel-group sum-and-broadcast matrix for the BN reduction (runs on MXU).
    lane = jnp.arange(WC)
    gmat = (lane[:, None] % Cout == lane[None, :] % Cout).astype(jnp.float32)

    gamma_v = jnp.tile(gamma.astype(jnp.float32).reshape(-1), W).reshape(1, WC)
    beta_v = jnp.tile(beta.astype(jnp.float32).reshape(-1), W).reshape(1, WC)
    a2 = jnp.asarray(prelu_a, jnp.float32).reshape(1, 1)

    kernel = functools.partial(end_deconv_kernel, inv_count=1.0 / (N * H * W))

    out = pl.pallas_call(
        kernel,
        out_shape=jax.ShapeDtypeStruct((N, H, WC), jnp.float32),
        grid=(2, N),   # (phase, batch); phase is the slow axis -> stats complete
        in_specs=[
            pl.BlockSpec((1, Hp, Wp * Cin), lambda p, b: (b, 0, 0)),
            pl.BlockSpec((K, Wp * Cin, WC), lambda p, b: (0, 0, 0)),
            pl.BlockSpec((WC, WC), lambda p, b: (0, 0)),
            pl.BlockSpec((1, WC), lambda p, b: (0, 0)),
            pl.BlockSpec((1, WC), lambda p, b: (0, 0)),
            pl.BlockSpec((1, 1), lambda p, b: (0, 0)),
        ],
        out_specs=pl.BlockSpec((1, H, WC), lambda p, b: (b, 0, 0)),
        scratch_shapes=[pltpu.VMEM((1, WC), jnp.float32),
                        pltpu.VMEM((1, WC), jnp.float32)],
        compiler_params=pltpu.CompilerParams(
            # BN batch statistics couple all blocks -> both axes sequential.
            dimension_semantics=("arbitrary", "arbitrary"),
            vmem_limit_bytes=32 * 1024 * 1024,
            allow_input_fusion=[True, False, False, False, False, False],
        ),
    )(xp, w_big, gmat, gamma_v, beta_v, a2)

    out = out.reshape(N, H, W, Cout)
    return jnp.transpose(out, (0, 3, 1, 2))   # back to NCHW to match PyTorch


def end_deconv_reference(x_nchw, wt, gamma, beta, prelu_a):
    """Plain-JAX reference (NCHW): ConvTranspose2d(s=1,p=1) == conv w/ flipped kernel."""
    K = wt.shape[2]
    padc = K - 1 - 1
    w_conv = jnp.transpose(jnp.flip(wt, axis=(2, 3)), (1, 0, 2, 3)).astype(jnp.float32)
    deconv = jax.lax.conv_general_dilated(
        x_nchw.astype(jnp.float32), w_conv,
        window_strides=(1, 1), padding=((padc, padc), (padc, padc)),
        dimension_numbers=('NCHW', 'OIHW', 'NCHW'))
    mean = jnp.mean(deconv, axis=(0, 2, 3), keepdims=True)
    var = jnp.mean((deconv - mean) ** 2, axis=(0, 2, 3), keepdims=True)
    y = (deconv - mean) * jax.lax.rsqrt(var + 1e-5)
    y = y * gamma.reshape(1, -1, 1, 1) + beta.reshape(1, -1, 1, 1)
    a = jnp.asarray(prelu_a, jnp.float32)
    return jnp.where(y > 0, y, a * y)


if __name__ == "__main__":
    key = jax.random.PRNGKey(0)
    N, Cin, Cout, H, W, K = 2, 4, 8, 16, 16, 3

    k_x, k_w = jax.random.split(key)
    x = jax.random.normal(k_x, (N, Cin, H, W), dtype=jnp.float32)
    # ConvTranspose2d weight shape: (in_ch, out_ch, kH, kW)
    fan_scale = 1.0 / (Cin * K * K) ** 0.5
    wt = jax.random.normal(k_w, (Cin, Cout, K, K), dtype=jnp.float32) * fan_scale
    # BatchNorm2d / PReLU default init
    gamma = jnp.ones((Cout,), jnp.float32)
    beta = jnp.zeros((Cout,), jnp.float32)
    prelu_a = 0.25

    out = jax.jit(end_deconv_pallas)(x, wt, gamma, beta, prelu_a)
    out = jax.block_until_ready(out)

    ref = end_deconv_reference(x, wt, gamma, beta, prelu_a)
    assert out.shape == (N, Cout, H, W)
    max_err = float(jnp.max(jnp.abs(out - ref)))
    assert jnp.allclose(out, ref, rtol=1e-3, atol=1e-3), f"max abs err = {max_err}"

    print("KERNEL_OK")
</pallas_src>

<mosaic_0001>
module attributes {stable_mosaic.version = 11 : i64} {
  func.func @end_deconv_kernel(%arg0: i32, %arg1: i32, %arg2: memref<1x18x72xf32, #tpu.memory_space<vmem>>, %arg3: memref<3x72x128xf32, #tpu.memory_space<vmem>>, %arg4: memref<128x128xf32, #tpu.memory_space<vmem>>, %arg5: memref<1x128xf32, #tpu.memory_space<vmem>>, %arg6: memref<1x128xf32, #tpu.memory_space<vmem>>, %arg7: memref<1x1xf32, #tpu.memory_space<vmem>>, %arg8: memref<1x16x128xf32, #tpu.memory_space<vmem>>, %arg9: memref<1x128xf32, #tpu.memory_space<vmem>>, %arg10: memref<1x128xf32, #tpu.memory_space<vmem>>) attributes {dimension_semantics = [#tpu.dimension_semantics<arbitrary>, #tpu.dimension_semantics<arbitrary>], iteration_bounds = array<i64: 2, 2>, scalar_prefetch = 0 : i64, scratch_operands = 2 : i64, tpu.core_type = #tpu.core_type<tc>, window_params = [{transform_indices = @transform_0, window_bounds = array<i64: 1, 18, 72>}, {pipeline_mode = #tpu.pipeline_mode<synchronous>, transform_indices = @transform_1, window_bounds = array<i64: 3, 72, 128>}, {pipeline_mode = #tpu.pipeline_mode<synchronous>, transform_indices = @transform_2, window_bounds = array<i64: 128, 128>}, {pipeline_mode = #tpu.pipeline_mode<synchronous>, transform_indices = @transform_3, window_bounds = array<i64: 1, 128>}, {pipeline_mode = #tpu.pipeline_mode<synchronous>, transform_indices = @transform_4, window_bounds = array<i64: 1, 128>}, {pipeline_mode = #tpu.pipeline_mode<synchronous>, transform_indices = @transform_5, window_bounds = array<i64: 1, 1>}, {transform_indices = @transform_6, window_bounds = array<i64: 1, 16, 128>}]} {
    %cst = arith.constant 0.000000e+00 : f32
    %0 = vector.broadcast %cst : f32 to vector<16x128xf32>
    %c0 = arith.constant 0 : index
    %c0_0 = arith.constant 0 : index
    %c0_1 = arith.constant 0 : index
    %1 = vector.load %arg2[%c0, %c0_0, %c0_1] : memref<1x18x72xf32, #tpu.memory_space<vmem>>, vector<1x16x72xf32>
    %2 = vector.shape_cast %1 : vector<1x16x72xf32> to vector<16x72xf32>
    %c0_2 = arith.constant 0 : index
    %c0_3 = arith.constant 0 : index
    %c0_4 = arith.constant 0 : index
    %3 = vector.load %arg3[%c0_2, %c0_3, %c0_4] : memref<3x72x128xf32, #tpu.memory_space<vmem>>, vector<1x72x128xf32>
    %4 = vector.shape_cast %3 : vector<1x72x128xf32> to vector<72x128xf32>
    %cst_5 = arith.constant dense<0.000000e+00> : vector<16x128xf32>
    %5 = tpu.matmul %2, %4, %cst_5 {dimension_numbers = #tpu.dot_dimension_numbers<[1], [0], [0], [1], [0, 0, 1, 1], [], []>} : vector<16x72xf32>, vector<72x128xf32>, vector<16x128xf32> -> vector<16x128xf32>
    %6 = arith.addf %0, %5 : vector<16x128xf32>
    %c0_6 = arith.constant 0 : index
    %c1 = arith.constant 1 : index
    %c0_7 = arith.constant 0 : index
    %7 = vector.load %arg2[%c0_6, %c1, %c0_7] : memref<1x18x72xf32, #tpu.memory_space<vmem>>, vector<1x16x72xf32>
    %8 = vector.shape_cast %7 : vector<1x16x72xf32> to vector<16x72xf32>
    %c1_8 = arith.constant 1 : index
    %c0_9 = arith.constant 0 : index
    %c0_10 = arith.constant 0 : index
    %9 = vector.load %arg3[%c1_8, %c0_9, %c0_10] : memref<3x72x128xf32, #tpu.memory_space<vmem>>, vector<1x72x128xf32>
    %10 = vector.shape_cast %9 : vector<1x72x128xf32> to vector<72x128xf32>
    %cst_11 = arith.constant dense<0.000000e+00> : vector<16x128xf32>
    %11 = tpu.matmul %8, %10, %cst_11 {dimension_numbers = #tpu.dot_dimension_numbers<[1], [0], [0], [1], [0, 0, 1, 1], [], []>} : vector<16x72xf32>, vector<72x128xf32>, vector<16x128xf32> -> vector<16x128xf32>
    %12 = arith.addf %6, %11 : vector<16x128xf32>
    %c0_12 = arith.constant 0 : index
    %c2 = arith.constant 2 : index
    %c0_13 = arith.constant 0 : index
    %13 = vector.load %arg2[%c0_12, %c2, %c0_13] : memref<1x18x72xf32, #tpu.memory_space<vmem>>, vector<1x16x72xf32>
    %14 = vector.shape_cast %13 : vector<1x16x72xf32> to vector<16x72xf32>
    %c2_14 = arith.constant 2 : index
    %c0_15 = arith.constant 0 : index
    %c0_16 = arith.constant 0 : index
    %15 = vector.load %arg3[%c2_14, %c0_15, %c0_16] : memref<3x72x128xf32, #tpu.memory_space<vmem>>, vector<1x72x128xf32>
    %16 = vector.shape_cast %15 : vector<1x72x128xf32> to vector<72x128xf32>
    %cst_17 = arith.constant dense<0.000000e+00> : vector<16x128xf32>
    %17 = tpu.matmul %14, %16, %cst_17 {dimension_numbers = #tpu.dot_dimension_numbers<[1], [0], [0], [1], [0, 0, 1, 1], [], []>} : vector<16x72xf32>, vector<72x128xf32>, vector<16x128xf32> -> vector<16x128xf32>
    %18 = arith.addf %12, %17 : vector<16x128xf32>
    %c0_i32 = arith.constant 0 : i32
    %19 = arith.cmpi eq, %arg0, %c0_i32 : i32
    %c0_i32_18 = arith.constant 0 : i32
    %20 = arith.cmpi eq, %arg1, %c0_i32_18 : i32
    %21 = arith.andi %19, %20 : i1
    %22 = arith.extui %21 : i1 to i32
    %c0_i32_19 = arith.constant 0 : i32
    %23 = arith.cmpi ne, %22, %c0_i32_19 : i32
    scf.if %23 {
      %cst_23 = arith.constant 0.000000e+00 : f32
      %30 = vector.broadcast %cst_23 : f32 to vector<1x128xf32>
      %c0_24 = arith.constant 0 : index
      %c0_25 = arith.constant 0 : index
      %31 = vector.load %arg9[%c0_24, %c0_25] : memref<1x128xf32, #tpu.memory_space<vmem>>, vector<1x128xf32>
      tpu.vector_store %arg9[%c0_24, %c0_25], %30 {strides = array<i32>} : memref<1x128xf32, #tpu.memory_space<vmem>>, vector<1x128xf32>,
      %cst_26 = arith.constant 0.000000e+00 : f32
      %32 = vector.broadcast %cst_26 : f32 to vector<1x128xf32>
      %c0_27 = arith.constant 0 : index
      %c0_28 = arith.constant 0 : index
      %33 = vector.load %arg10[%c0_27, %c0_28] : memref<1x128xf32, #tpu.memory_space<vmem>>, vector<1x128xf32>
      tpu.vector_store %arg10[%c0_27, %c0_28], %32 {strides = array<i32>} : memref<1x128xf32, #tpu.memory_space<vmem>>, vector<1x128xf32>,
    } else {
    }
    %c0_i32_20 = arith.constant 0 : i32
    %24 = arith.cmpi eq, %arg0, %c0_i32_20 : i32
    %25 = arith.extui %24 : i1 to i32
    %c0_i32_21 = arith.constant 0 : i32
    %26 = arith.cmpi ne, %25, %c0_i32_21 : i32
    scf.if %26 {
      %c0_23 = arith.constant 0 : index
      %c0_24 = arith.constant 0 : index
      %30 = vector.load %arg9[%c0_23, %c0_24] : memref<1x128xf32, #tpu.memory_space<vmem>>, vector<1x128xf32>
      %cst_25 = arith.constant dense<0.000000e+00> : vector<128xf32>
      %31 = vector.multi_reduction <add>, %18, %cst_25 [0] : vector<16x128xf32> to vector<128xf32>
      %32 = vector.shape_cast %31 : vector<128xf32> to vector<1x128xf32>
      %33 = arith.addf %30, %32 : vector<1x128xf32>
      %c0_26 = arith.constant 0 : index
      %c0_27 = arith.constant 0 : index
      %34 = vector.load %arg9[%c0_26, %c0_27] : memref<1x128xf32, #tpu.memory_space<vmem>>, vector<1x128xf32>
      tpu.vector_store %arg9[%c0_26, %c0_27], %33 {strides = array<i32>} : memref<1x128xf32, #tpu.memory_space<vmem>>, vector<1x128xf32>,
      %c0_28 = arith.constant 0 : index
      %c0_29 = arith.constant 0 : index
      %35 = vector.load %arg10[%c0_28, %c0_29] : memref<1x128xf32, #tpu.memory_space<vmem>>, vector<1x128xf32>
      %36 = arith.mulf %18, %18 : vector<16x128xf32>
      %cst_30 = arith.constant dense<0.000000e+00> : vector<128xf32>
      %37 = vector.multi_reduction <add>, %36, %cst_30 [0] : vector<16x128xf32> to vector<128xf32>
      %38 = vector.shape_cast %37 : vector<128xf32> to vector<1x128xf32>
      %39 = arith.addf %35, %38 : vector<1x128xf32>
      %c0_31 = arith.constant 0 : index
      %c0_32 = arith.constant 0 : index
      %40 = vector.load %arg10[%c0_31, %c0_32] : memref<1x128xf32, #tpu.memory_space<vmem>>, vector<1x128xf32>
      tpu.vector_store %arg10[%c0_31, %c0_32], %39 {strides = array<i32>} : memref<1x128xf32, #tpu.memory_space<vmem>>, vector<1x128xf32>,
      %c0_33 = arith.constant 0 : index
      %c0_34 = arith.constant 0 : index
      %c0_35 = arith.constant 0 : index
      %41 = vector.load %arg8[%c0_33, %c0_34, %c0_35] : memref<1x16x128xf32, #tpu.memory_space<vmem>>, vector<1x16x128xf32>
      %42 = vector.shape_cast %41 : vector<1x16x128xf32> to vector<16x128xf32>
      %43 = vector.shape_cast %18 : vector<16x128xf32> to vector<1x16x128xf32>
      tpu.vector_store %arg8[%c0_33, %c0_34, %c0_35], %43 {strides = array<i32>} : memref<1x16x128xf32, #tpu.memory_space<vmem>>, vector<1x16x128xf32>,
    } else {
    }
    %c1_i32 = arith.constant 1 : i32
    %27 = arith.cmpi eq, %arg0, %c1_i32 : i32
    %28 = arith.extui %27 : i1 to i32
    %c0_i32_22 = arith.constant 0 : i32
    %29 = arith.cmpi ne, %28, %c0_i32_22 : i32
    scf.if %29 {
      %c0_23 = arith.constant 0 : index
      %c0_24 = arith.constant 0 : index
      %30 = vector.load %arg9[%c0_23, %c0_24] : memref<1x128xf32, #tpu.memory_space<vmem>>, vector<1x128xf32>
      %c0_25 = arith.constant 0 : index
      %c0_26 = arith.constant 0 : index
      %31 = vector.load %arg4[%c0_25, %c0_26] : memref<128x128xf32, #tpu.memory_space<vmem>>, vector<128x128xf32>
      %cst_27 = arith.constant dense<0.000000e+00> : vector<1x128xf32>
      %32 = tpu.matmul %30, %31, %cst_27 {dimension_numbers = #tpu.dot_dimension_numbers<[1], [0], [0], [1], [0, 0, 1, 1], [], []>} : vector<1x128xf32>, vector<128x128xf32>, vector<1x128xf32> -> vector<1x128xf32>
      %cst_28 = arith.constant 0.001953125 : f32
      %33 = vector.broadcast %cst_28 : f32 to vector<1x128xf32>
      %34 = arith.mulf %32, %33 : vector<1x128xf32>
      %c0_29 = arith.constant 0 : index
      %c0_30 = arith.constant 0 : index
      %35 = vector.load %arg10[%c0_29, %c0_30] : memref<1x128xf32, #tpu.memory_space<vmem>>, vector<1x128xf32>
      %c0_31 = arith.constant 0 : index
      %c0_32 = arith.constant 0 : index
      %36 = vector.load %arg4[%c0_31, %c0_32] : memref<128x128xf32, #tpu.memory_space<vmem>>, vector<128x128xf32>
      %cst_33 = arith.constant dense<0.000000e+00> : vector<1x128xf32>
      %37 = tpu.matmul %35, %36, %cst_33 {dimension_numbers = #tpu.dot_dimension_numbers<[1], [0], [0], [1], [0, 0, 1, 1], [], []>} : vector<1x128xf32>, vector<128x128xf32>, vector<1x128xf32> -> vector<1x128xf32>
      %cst_34 = arith.constant 0.001953125 : f32
      %38 = vector.broadcast %cst_34 : f32 to vector<1x128xf32>
      %39 = arith.mulf %37, %38 : vector<1x128xf32>
      %40 = arith.mulf %34, %34 : vector<1x128xf32>
      %41 = arith.subf %39, %40 : vector<1x128xf32>
      %cst_35 = arith.constant 9.99999974E-6 : f32
      %42 = vector.broadcast %cst_35 : f32 to vector<1x128xf32>
      %43 = arith.addf %41, %42 : vector<1x128xf32>
      %44 = math.rsqrt %43 : vector<1x128xf32>
      %c0_36 = arith.constant 0 : index
      %c0_37 = arith.constant 0 : index
      %45 = vector.load %arg5[%c0_36, %c0_37] : memref<1x128xf32, #tpu.memory_space<vmem>>, vector<1x128xf32>
      %46 = arith.mulf %45, %44 : vector<1x128xf32>
      %c0_38 = arith.constant 0 : index
      %c0_39 = arith.constant 0 : index
      %47 = vector.load %arg6[%c0_38, %c0_39] : memref<1x128xf32, #tpu.memory_space<vmem>>, vector<1x128xf32>
      %48 = arith.mulf %34, %46 : vector<1x128xf32>
      %49 = arith.subf %47, %48 : vector<1x128xf32>
      %50 = vector.broadcast %46 : vector<1x128xf32> to vector<16x128xf32>
      %51 = arith.mulf %18, %50 : vector<16x128xf32>
      %52 = vector.broadcast %49 : vector<1x128xf32> to vector<16x128xf32>
      %53 = arith.addf %51, %52 : vector<16x128xf32>
      %cst_40 = arith.constant 0.000000e+00 : f32
      %54 = vector.broadcast %cst_40 : f32 to vector<16x128xf32>
      %55 = arith.cmpf ogt, %53, %54 : vector<16x128xf32>
      %c0_41 = arith.constant 0 : index
      %c0_42 = arith.constant 0 : index
      %56 = vector.load %arg7[%c0_41, %c0_42] : memref<1x1xf32, #tpu.memory_space<vmem>>, vector<1x1xf32>
      %57 = vector.broadcast %56 : vector<1x1xf32> to vector<16x128xf32>
      %58 = arith.mulf %53, %57 : vector<16x128xf32>
      %59 = arith.select %55, %53, %58 : vector<16x128xi1>, vector<16x128xf32>
      %c0_43 = arith.constant 0 : index
      %c0_44 = arith.constant 0 : index
      %c0_45 = arith.constant 0 : index
      %60 = vector.load %arg8[%c0_43, %c0_44, %c0_45] : memref<1x16x128xf32, #tpu.memory_space<vmem>>, vector<1x16x128xf32>
      %61 = vector.shape_cast %60 : vector<1x16x128xf32> to vector<16x128xf32>
      %62 = vector.shape_cast %59 : vector<16x128xf32> to vector<1x16x128xf32>
      tpu.vector_store %arg8[%c0_43, %c0_44, %c0_45], %62 {strides = array<i32>} : memref<1x16x128xf32, #tpu.memory_space<vmem>>, vector<1x16x128xf32>,
    } else {
    }
    return
  }
  func.func @transform_0(%arg0: i32, %arg1: i32) -> (i32, i32, i32) {
    %c0_i32 = arith.constant 0 : i32
    %c0_i32_0 = arith.constant 0 : i32
    %c0_i32_1 = arith.constant 0 : i32
    return %arg1, %c0_i32, %c0_i32_0 : i32, i32, i32
  }
  func.func @transform_1(%arg0: i32, %arg1: i32) -> (i32, i32, i32) {
    %c0_i32 = arith.constant 0 : i32
    %c0_i32_0 = arith.constant 0 : i32
    %c0_i32_1 = arith.constant 0 : i32
    %c0_i32_2 = arith.constant 0 : i32
    return %c0_i32, %c0_i32_0, %c0_i32_1 : i32, i32, i32
  }
  func.func @transform_2(%arg0: i32, %arg1: i32) -> (i32, i32) {
    %c0_i32 = arith.constant 0 : i32
    %c0_i32_0 = arith.constant 0 : i32
    %c0_i32_1 = arith.constant 0 : i32
    return %c0_i32, %c0_i32_0 : i32, i32
  }
  func.func @transform_3(%arg0: i32, %arg1: i32) -> (i32, i32) {
    %c0_i32 = arith.constant 0 : i32
    %c0_i32_0 = arith.constant 0 : i32
    %c0_i32_1 = arith.constant 0 : i32
    return %c0_i32, %c0_i32_0 : i32, i32
  }
  func.func @transform_4(%arg0: i32, %arg1: i32) -> (i32, i32) {
    %c0_i32 = arith.constant 0 : i32
    %c0_i32_0 = arith.constant 0 : i32
    %c0_i32_1 = arith.constant 0 : i32
    return %c0_i32, %c0_i32_0 : i32, i32
  }
  func.func @transform_5(%arg0: i32, %arg1: i32) -> (i32, i32) {
    %c0_i32 = arith.constant 0 : i32
    %c0_i32_0 = arith.constant 0 : i32
    %c0_i32_1 = arith.constant 0 : i32
    return %c0_i32, %c0_i32_0 : i32, i32
  }
  func.func @transform_6(%arg0: i32, %arg1: i32) -> (i32, i32, i32) {
    %c0_i32 = arith.constant 0 : i32
    %c0_i32_0 = arith.constant 0 : i32
    %c0_i32_1 = arith.constant 0 : i32
    return %arg1, %c0_i32, %c0_i32_0 : i32, i32, i32
  }
}

</mosaic_0001>

<llo_original>
// kernel: tile.13
$region0: #{tile.13}
  #allocation0 [shape = 's32[1]{0}', space=sflag, size = 0x4, scoped, tag = 'scoped memory for tile.13']
  %s0 = inlined_call_operand.vmem [shape: f32[8], index: 0, kind: input, shape index: {}]
  %s1 = inlined_call_operand.vmem [shape: f32[16,8], index: 1, kind: output, shape index: {}]
  // Predicated region
  $region2: #{tile.13} parent=0 // pred_check
    _
  $region3: #{tile.13} parent=0 // pred_check_branch
    %3 = sbr.rel (0) target = $region5
  $region4: #{tile.13} parent=0 // pred_region
    _
  $region5: #{tile.13} parent=0 // pred_fallthru
    _
  %v4 = vld [vmem:[%s0] ss:$0 sm:$0xff]
  %5 = vst [vmem:[%s1] sm:$0xff] %v4
  %s6 = scalar_lea.vmem %s1, 8
  %7 = vst [vmem:[%s6] sm:$0xff] %v4

// kernel: tile.14
$region0: #{tile.14}
  %s0 = inlined_call_operand.vmem [shape: f32[16,8], index: 0, kind: input, shape index: {}]
  %s1 = inlined_call_operand.vmem [shape: f32[1,128], index: 1, kind: output, shape index: {}]
  $region1: #{tile.14} parent=0
    #allocation0 [shape = 'u8[4096]{0}', space=vmem, size = 0x1000, scoped, tag = 'scoped mem for output reshape']
    %v2 = vld [vmem:[%s0] sm:$0x1]
    %vm3 = vcmask 64512
    %4 = vst.msk [vmem:[#allocation0] sm:$0x1] %vm3, %v2
    %s5 = scalar_lea.vmem %s0, 15
    %v6 = vld [vmem:[%s5] sm:$0x1]
    %7 = vrot.lane.b32.xlu0 %v6, 120
    %v8 = vpop.permute.xlu0 %7
    %vm9 = vcmask 1048512
    %10 = vst.msk [vmem:[#allocation0] sm:$0x1] %vm9, %v8
    %s11 = scalar_lea.vmem %s0, 14
    %v12 = vld [vmem:[%s11] sm:$0x1]
    %13 = vrot.lane.b32.xlu0 %v12, 112
    %v14 = vpop.permute.xlu0 %13
    %vm15 = vcmask 982912
    %16 = vst.msk [vmem:[#allocation0] sm:$0x1] %vm15, %v14
    %s17 = scalar_lea.vmem %s0, 13
    %v18 = vld [vmem:[%s17] sm:$0x1]
    %19 = vrot.lane.b32.xlu0 %v18, 104
    %v20 = vpop.permute.xlu0 %19
    %vm21 = vcmask 917312
    %22 = vst.msk [vmem:[#allocation0] sm:$0x1] %vm21, %v20
    %s23 = scalar_lea.vmem %s0, 12
    %v24 = vld [vmem:[%s23] sm:$0x1]
    %25 = vrot.lane.b32.xlu0 %v24, 96
    %v26 = vpop.permute.xlu0 %25
    %vm27 = vcmask 851712
    %28 = vst.msk [vmem:[#allocation0] sm:$0x1] %vm27, %v26
    %s29 = scalar_lea.vmem %s0, 11
    %v30 = vld [vmem:[%s29] sm:$0x1]
    %31 = vrot.lane.b32.xlu0 %v30, 88
    %v32 = vpop.permute.xlu0 %31
    %vm33 = vcmask 786112
    %34 = vst.msk [vmem:[#allocation0] sm:$0x1] %vm33, %v32
    %s35 = scalar_lea.vmem %s0, 10
    %v36 = vld [vmem:[%s35] sm:$0x1]
    %37 = vrot.lane.b32.xlu0 %v36, 80
    %v38 = vpop.permute.xlu0 %37
    %vm39 = vcmask 720512
    %40 = vst.msk [vmem:[#allocation0] sm:$0x1] %vm39, %v38
    %s41 = scalar_lea.vmem %s0, 9
    %v42 = vld [vmem:[%s41] sm:$0x1]
    %43 = vrot.lane.b32.xlu0 %v42, 72
    %v44 = vpop.permute.xlu0 %43
    %vm45 = vcmask 654912
    %46 = vst.msk [vmem:[#allocation0] sm:$0x1] %vm45, %v44
    %s47 = scalar_lea.vmem %s0, 8
    %v48 = vld [vmem:[%s47] sm:$0x1]
    %49 = vrot.lane.b32.xlu0 %v48, 64
    %v50 = vpop.permute.xlu0 %49
    %vm51 = vcmask 589312
    %52 = vst.msk [vmem:[#allocation0] sm:$0x1] %vm51, %v50
    %s53 = scalar_lea.vmem %s0, 7
    %v54 = vld [vmem:[%s53] sm:$0x1]
    %55 = vrot.lane.b32.xlu0 %v54, 56
    %v56 = vpop.permute.xlu0 %55
    %vm57 = vcmask 523712
    %58 = vst.msk [vmem:[#allocation0] sm:$0x1] %vm57, %v56
    %s59 = scalar_lea.vmem %s0, 6
    %v60 = vld [vmem:[%s59] sm:$0x1]
    %61 = vrot.lane.b32.xlu0 %v60, 48
    %v62 = vpop.permute.xlu0 %61
    %vm63 = vcmask 458112
    %64 = vst.msk [vmem:[#allocation0] sm:$0x1] %vm63, %v62
    %s65 = scalar_lea.vmem %s0, 5
    %v66 = vld [vmem:[%s65] sm:$0x1]
    %67 = vrot.lane.b32.xlu0 %v66, 40
    %v68 = vpop.permute.xlu0 %67
    %vm69 = vcmask 392512
    %70 = vst.msk [vmem:[#allocation0] sm:$0x1] %vm69, %v68
    %s71 = scalar_lea.vmem %s0, 4
    %v72 = vld [vmem:[%s71] sm:$0x1]
    %73 = vrot.lane.b32.xlu0 %v72, 32
    %v74 = vpop.permute.xlu0 %73
    %vm75 = vcmask 326912
    %76 = vst.msk [vmem:[#allocation0] sm:$0x1] %vm75, %v74
    %s77 = scalar_lea.vmem %s0, 3
    %v78 = vld [vmem:[%s77] sm:$0x1]
    %79 = vrot.lane.b32.xlu0 %v78, 24
    %v80 = vpop.permute.xlu0 %79
    %vm81 = vcmask 261312
    %82 = vst.msk [vmem:[#allocation0] sm:$0x1] %vm81, %v80
    %s83 = scalar_lea.vmem %s0, 2
    %v84 = vld [vmem:[%s83] sm:$0x1]
    %85 = vrot.lane.b32.xlu0 %v84, 16
    %v86 = vpop.permute.xlu0 %85
    %vm87 = vcmask 195712
    %88 = vst.msk [vmem:[#allocation0] sm:$0x1] %vm87, %v86
    %s89 = scalar_lea.vmem %s0, 1
    %v90 = vld [vmem:[%s89] sm:$0x1]
    %91 = vrot.lane.b32.xlu0 %v90, 8
    %v92 = vpop.permute.xlu0 %91
    %vm93 = vcmask 130112
    %94 = vst.msk [vmem:[#allocation0] sm:$0x1] %vm93, %v92
    %s96 = sshllo.u32 0, 1
    %v98 = vld [vmem:[#allocation0] sm:%s96]
    %s99 = sshllo.u32 0, 1
    %100 = vst [vmem:[%s1] sm:%s99] %v98

// kernel: end_deconv_pallas.1
$region0: #{end_deconv_pallas.1}
  #allocation0 [shape = 'u32[]', space=smem, size = 0x4, offset = 0x4, fixed_abs, tag = 'smem constant byte address 0x4 - core index']
  #allocation1 [shape = 'u32[144,128]{1,0:T(1,128)}', space=vmem, size = 0x12000, scoped, tag = 'internal scratch']
  #allocation2 [shape = 'f32[1,128]{1,0:T(1,128)}', space=vmem, size = 0x200, scoped, tag = 'scratch operand']
  #allocation3 [shape = 'f32[1,128]{1,0:T(1,128)}', space=vmem, size = 0x200, scoped, tag = 'scratch operand']
  #allocation4 [shape = 'f32[1,1]{1,0:T(1,128)S(1)}', space=vmem, size = 0x200, scoped, tag = 'scoped memory for end_deconv_pallas.1']
  %s0 = inlined_call_operand.vmem [shape: f32[2,18,72], index: 0, kind: input, shape index: {}]
  %s1 = inlined_call_operand.vmem [shape: f32[3,72,128], index: 1, kind: input, shape index: {}]
  %s2 = inlined_call_operand.vmem [shape: f32[128,128], index: 2, kind: input, shape index: {}]
  %s3 = inlined_call_operand.vmem [shape: f32[1,128], index: 3, kind: input, shape index: {}]
  %s4 = inlined_call_operand.vmem [shape: f32[1,128], index: 4, kind: input, shape index: {}]
  %s5 = inlined_call_operand.<no memory space> [shape: f32[1,1], index: 5, kind: input, shape index: {}]
  %s6 = inlined_call_operand.vmem [shape: f32[2,16,128], index: 6, kind: output, shape index: {}]
  %s7 = sld [smem:[#allocation0]]
  $region69: #{end_deconv_pallas.1} parent=0
    _
  %s9 = ssub.s32 1, %s7
  %s10 = scalar_select 0, %s9, %s7
  %v11 = vstv %s5
  %12 = vst [vmem:[#allocation4] sm:$0x1] %v11
  loop: start=0, step=1, limit=6
  $region2: #{end_deconv_pallas.1} parent=0 // loop_pre_header
    _
  $region3: #{end_deconv_pallas.1} parent=0 // loop_header
    %s14 = sphi 0, %s18
    %p15 = scmp.ge.s32.totalorder %s14, 6
    %s21 = sphi 0, %s33
    %s22 = sphi 0, %s29
    %s23 = sphi 0, %s21
    %s24 = sphi 0, %s22
    %s25 = sphi 0, %s23
    %s26 = sphi 0, %s24
    %s36 = sphi 0, %s38
    %s39 = sphi 0, %s36
    %s40 = sphi 0, %s39
    %s56 = sphi 0, %s40
    %s60 = sphi 0, %s60
    %s62 = sphi 0, %s60
    %s63 = sphi 0, %s62
    %s77 = sphi 0, %s63
    %s81 = sphi 0, %s81
    %s83 = sphi 0, %s81
    %s84 = sphi 0, %s83
    %s98 = sphi 0, %s84
    %s102 = sphi 0, %s102
    %s104 = sphi 0, %s102
    %s105 = sphi 0, %s104
    %s119 = sphi 0, %s105
    %s123 = sphi 0, %s123
    %s125 = sphi 0, %s123
    %s126 = sphi 0, %s125
    %s140 = sphi 0, %s126
    %s144 = sphi 0, %s144
    %s146 = sphi 0, %s144
    %s147 = sphi 0, %s146
    %s161 = sphi 0, %s147
    %s167 = sphi 0, %s169
    %s170 = sphi 0, %s167
    %s171 = sphi 0, %s170
    %s187 = sphi 0, %s171
  $region4: #{end_deconv_pallas.1} parent=0 // loop_header_branch
    %17 = sbr.rel (%p15) target = $region8
  $region5: #{end_deconv_pallas.1} parent=0 // loop_body
    %s19 = ssub.s32 %s14, 1
    %s20 = ssub.s32 %s14, 2
    %s27 = sadd.s32 1, %s22
    %p28 = scmp.ge.s32.totalorder %s27, 2
    %s29 = scalar_select %p28, 0, %s27
    %s30 = sadd.s32 1, %s21
    %s31 = scalar_select %p28, %s30, %s21
    %p32 = scmp.ge.s32.totalorder %s31, 2
    %s33 = scalar_select %p32, 0, %s31
    %s34 = ssub.s32 %s22, %s29
    %p35 = scmp.eq.s32.totalorder %s34, 0
    %s37 = sadd.s32 %s36, 1
    %s38 = scalar_select %p35, %s36, %s37
    %p41 = pneg %p35
    %p42 = scmp.eq.s32.totalorder %s14, 3
    %p43 = por %p41, %p42
    %p44 = scmp.ne.s32.totalorder %s36, %s39
    %p45 = scmp.eq.s32.totalorder %s14, 0
    %p46 = por %p44, %p45
    %p47 = scmp.ne.s32.totalorder %s36, %s39
    %p48 = scmp.eq.s32.totalorder %s19, 3
    %p49 = por %p47, %p48
    %p50 = scmp.ne.s32.totalorder %s39, %s40
    %p51 = scmp.eq.s32.totalorder %s19, 0
    %p52 = por %p50, %p51
    %p53 = scmp.ne.s32.totalorder %s39, %s40
    %p54 = scmp.eq.s32.totalorder %s20, 3
    %p55 = por %p53, %p54
    %p57 = scmp.ne.s32.totalorder %s40, %s56
    %p58 = scmp.eq.s32.totalorder %s20, 0
    %p59 = por %p57, %p58
    %s61 = sadd.s32 %s60, 1
    %p64 = scmp.eq.s32.totalorder %s14, 3
    %p65 = scmp.ne.s32.totalorder %s60, %s62
    %p66 = scmp.eq.s32.totalorder %s14, 0
    %p67 = por %p65, %p66
    %p68 = scmp.ne.s32.totalorder %s60, %s62
    %p69 = scmp.eq.s32.totalorder %s19, 3
    %p70 = por %p68, %p69
    %p71 = scmp.ne.s32.totalorder %s62, %s63
    %p72 = scmp.eq.s32.totalorder %s19, 0
    %p73 = por %p71, %p72
    %p74 = scmp.ne.s32.totalorder %s62, %s63
    %p75 = scmp.eq.s32.totalorder %s20, 3
    %p76 = por %p74, %p75
    %p78 = scmp.ne.s32.totalorder %s63, %s77
    %p79 = scmp.eq.s32.totalorder %s20, 0
    %p80 = por %p78, %p79
    %s82 = sadd.s32 %s81, 1
    %p85 = scmp.eq.s32.totalorder %s14, 3
    %p86 = scmp.ne.s32.totalorder %s81, %s83
    %p87 = scmp.eq.s32.totalorder %s14, 0
    %p88 = por %p86, %p87
    %p89 = scmp.ne.s32.totalorder %s81, %s83
    %p90 = scmp.eq.s32.totalorder %s19, 3
    %p91 = por %p89, %p90
    %p92 = scmp.ne.s32.totalorder %s83, %s84
    %p93 = scmp.eq.s32.totalorder %s19, 0
    %p94 = por %p92, %p93
    %p95 = scmp.ne.s32.totalorder %s83, %s84
    %p96 = scmp.eq.s32.totalorder %s20, 3
    %p97 = por %p95, %p96
    %p99 = scmp.ne.s32.totalorder %s84, %s98
    %p100 = scmp.eq.s32.totalorder %s20, 0
    %p101 = por %p99, %p100
    %s103 = sadd.s32 %s102, 1
    %p106 = scmp.eq.s32.totalorder %s14, 3
    %p107 = scmp.ne.s32.totalorder %s102, %s104
    %p108 = scmp.eq.s32.totalorder %s14, 0
    %p109 = por %p107, %p108
    %p110 = scmp.ne.s32.totalorder %s102, %s104
    %p111 = scmp.eq.s32.totalorder %s19, 3
    %p112 = por %p110, %p111
    %p113 = scmp.ne.s32.totalorder %s104, %s105
    %p114 = scmp.eq.s32.totalorder %s19, 0
    %p115 = por %p113, %p114
    %p116 = scmp.ne.s32.totalorder %s104, %s105
    %p117 = scmp.eq.s32.totalorder %s20, 3
    %p118 = por %p116, %p117
    %p120 = scmp.ne.s32.totalorder %s105, %s119
    %p121 = scmp.eq.s32.totalorder %s20, 0
    %p122 = por %p120, %p121
    %s124 = sadd.s32 %s123, 1
    %p127 = scmp.eq.s32.totalorder %s14, 3
    %p128 = scmp.ne.s32.totalorder %s123, %s125
    %p129 = scmp.eq.s32.totalorder %s14, 0
    %p130 = por %p128, %p129
    %p131 = scmp.ne.s32.totalorder %s123, %s125
    %p132 = scmp.eq.s32.totalorder %s19, 3
    %p133 = por %p131, %p132
    %p134 = scmp.ne.s32.totalorder %s125, %s126
    %p135 = scmp.eq.s32.totalorder %s19, 0
    %p136 = por %p134, %p135
    %p137 = scmp.ne.s32.totalorder %s125, %s126
    %p138 = scmp.eq.s32.totalorder %s20, 3
    %p139 = por %p137, %p138
    %p141 = scmp.ne.s32.totalorder %s126, %s140
    %p142 = scmp.eq.s32.totalorder %s20, 0
    %p143 = por %p141, %p142
    %s145 = sadd.s32 %s144, 1
    %p148 = scmp.eq.s32.totalorder %s14, 3
    %p149 = scmp.ne.s32.totalorder %s144, %s146
    %p150 = scmp.eq.s32.totalorder %s14, 0
    %p151 = por %p149, %p150
    %p152 = scmp.ne.s32.totalorder %s144, %s146
    %p153 = scmp.eq.s32.totalorder %s19, 3
    %p154 = por %p152, %p153
    %p155 = scmp.ne.s32.totalorder %s146, %s147
    %p156 = scmp.eq.s32.totalorder %s19, 0
    %p157 = por %p155, %p156
    %p158 = scmp.ne.s32.totalorder %s146, %s147
    %p159 = scmp.eq.s32.totalorder %s20, 3
    %p160 = por %p158, %p159
    %p162 = scmp.ne.s32.totalorder %s147, %s161
    %p163 = scmp.eq.s32.totalorder %s20, 0
    %p164 = por %p162, %p163
    %s165 = ssub.s32 %s22, %s29
    %p166 = scmp.eq.s32.totalorder %s165, 0
    %s168 = sadd.s32 %s167, 1
    %s169 = scalar_select %p166, %s167, %s168
    %p172 = pneg %p166
    %p173 = scmp.eq.s32.totalorder %s14, 3
    %p174 = por %p172, %p173
    %p175 = scmp.ne.s32.totalorder %s167, %s170
    %p176 = scmp.eq.s32.totalorder %s14, 0
    %p177 = por %p175, %p176
    %p178 = scmp.ne.s32.totalorder %s167, %s170
    %p179 = scmp.eq.s32.totalorder %s19, 3
    %p180 = por %p178, %p179
    %p181 = scmp.ne.s32.totalorder %s170, %s171
    %p182 = scmp.eq.s32.totalorder %s19, 0
    %p183 = por %p181, %p182
    %p184 = scmp.ne.s32.totalorder %s170, %s171
    %p185 = scmp.eq.s32.totalorder %s20, 3
    %p186 = por %p184, %p185
    %p188 = scmp.ne.s32.totalorder %s171, %s187
    %p189 = scmp.eq.s32.totalorder %s20, 0
    %p190 = por %p188, %p189
    %p191 = scmp.le.s32.totalorder 1, %s14
    %p192 = scmp.lt.s32.totalorder %s14, 5
    %p193 = pnand %p191, %p192
    %p194 = pneg %p193
    // Predicated region
    $region9: #{end_deconv_pallas.1} parent=5 // pred_check
      _
    $region10: #{end_deconv_pallas.1} parent=5 // pred_check_branch
      %196 = sbr.rel (%p193) target = $region12
    $region11: #{end_deconv_pallas.1} parent=5 // pred_region
      %s197 = ssub.s32 %s14, 1
      // Predicated region
      $region13: #{end_deconv_pallas.1} parent=11 // pred_check
        %p198 = pneg %p73
      $region14: #{end_deconv_pallas.1} parent=11 // pred_check_branch
        %200 = sbr.rel (%p198) target = $region16
      $region15: #{end_deconv_pallas.1} parent=11 // pred_region
        _
      $region16: #{end_deconv_pallas.1} parent=11 // pred_fallthru
        _
      // Predicated region
      $region17: #{end_deconv_pallas.1} parent=11 // pred_check
        %p201 = pneg %p94
      $region18: #{end_deconv_pallas.1} parent=11 // pred_check_branch
        %203 = sbr.rel (%p201) target = $region20
      $region19: #{end_deconv_pallas.1} parent=11 // pred_region
        _
      $region20: #{end_deconv_pallas.1} parent=11 // pred_fallthru
        _
      // Predicated region
      $region21: #{end_deconv_pallas.1} parent=11 // pred_check
        %p204 = pneg %p115
      $region22: #{end_deconv_pallas.1} parent=11 // pred_check_branch
        %206 = sbr.rel (%p204) target = $region24
      $region23: #{end_deconv_pallas.1} parent=11 // pred_region
        _
      $region24: #{end_deconv_pallas.1} parent=11 // pred_fallthru
        _
      // Predicated region
      $region25: #{end_deconv_pallas.1} parent=11 // pred_check
        %p207 = pneg %p136
      $region26: #{end_deconv_pallas.1} parent=11 // pred_check_branch
        %209 = sbr.rel (%p207) target = $region28
      $region27: #{end_deconv_pallas.1} parent=11 // pred_region
        _
      $region28: #{end_deconv_pallas.1} parent=11 // pred_fallthru
        _
      // Predicated region
      $region29: #{end_deconv_pallas.1} parent=11 // pred_check
        %p210 = pneg %p157
      $region30: #{end_deconv_pallas.1} parent=11 // pred_check_branch
        %212 = sbr.rel (%p210) target = $region32
      $region31: #{end_deconv_pallas.1} parent=11 // pred_region
        _
      $region32: #{end_deconv_pallas.1} parent=11 // pred_fallthru
        _
    $region12: #{end_deconv_pallas.1} parent=5 // pred_fallthru
      _
    %p213 = scmp.lt.s32.totalorder %s14, 4
    // Predicated region
    $region33: #{end_deconv_pallas.1} parent=5 // pred_check
      %p214 = pneg %p213
    $region34: #{end_deconv_pallas.1} parent=5 // pred_check_branch
      %216 = sbr.rel (%p214) target = $region36
    $region35: #{end_deconv_pallas.1} parent=5 // pred_region
      // Predicated region
      $region37: #{end_deconv_pallas.1} parent=35 // pred_check
        %p217 = pneg %p46
      $region38: #{end_deconv_pallas.1} parent=35 // pred_check_branch
        %219 = sbr.rel (%p217) target = $region40
      $region39: #{end_deconv_pallas.1} parent=35 // pred_region
        %p220 = scmp.lt.s32.totalorder %s22, 1
        %s221 = scalar_select %p220, %s22, 1
        %s222 = smul.addr %s221, 3
        %s223 = smul.addr %s222, 8
        %s224 = scalar_lea.vmem %s0, %s223
      $region40: #{end_deconv_pallas.1} parent=35 // pred_fallthru
        _
    $region36: #{end_deconv_pallas.1} parent=5 // pred_fallthru
      _
    %p225 = scmp.le.s32.totalorder 1, %s14
    %p226 = scmp.lt.s32.totalorder %s14, 5
    %p227 = pnand %p225, %p226
    %p228 = pneg %p227
    // Predicated region
    $region41: #{end_deconv_pallas.1} parent=5 // pred_check
      _
    $region42: #{end_deconv_pallas.1} parent=5 // pred_check_branch
      %230 = sbr.rel (%p227) target = $region44
    $region43: #{end_deconv_pallas.1} parent=5 // pred_region
      %s231 = ssub.s32 %s14, 1
      %p232 = scmp.lt.s32.totalorder %s24, 1
      %s233 = scalar_select %p232, %s24, 1
      %s234 = smul.addr %s233, 3
      %s235 = smul.addr %s234, 8
      %s236 = scalar_lea.vmem %s0, %s235
      %p237 = pneg %p52
      %p238 = pneg %p49
      %p239 = pneg %p73
      %p240 = pneg %p70
      %p241 = pneg %p94
      %p242 = pneg %p91
      %p243 = pneg %p115
      %p244 = pneg %p112
      %p245 = pneg %p136
      %p246 = pneg %p133
      %p247 = pneg %p157
      %p248 = pneg %p154
      %p249 = pneg %p183
      %p250 = pneg %p180
      %p251 = scmp.lt.s32.totalorder %s24, 1
      %s252 = scalar_select %p251, %s24, 1
      %s253 = smul.addr %s252, 2
      %s254 = smul.addr %s253, 8
      %s255 = scalar_lea.vmem %s6, %s254
      %p256 = scmp.lt.s32.totalorder %s24, 1
      %s257 = scalar_select %p256, %s24, 1
      %s258 = smul.addr %s257, 3
      %s259 = smul.addr %s258, 8
      %s260 = scalar_lea.vmem %s0, %s259
      %p261 = scmp.lt.s32.totalorder %s24, 1
      %s262 = scalar_select %p261, %s24, 1
      %s263 = smul.addr %s262, 2
      %s264 = smul.addr %s263, 8
      %s265 = scalar_lea.vmem %s6, %s264
      %v266 = vld [vmem:[%s260] sm:$0xff]
      %v267 = vld [vmem:[%s260 + $0x8] sm:$0xff]
      %v268 = vld [vmem:[%s1] sm:$0xff]
      %v269 = vld [vmem:[%s1 + $0x8] sm:$0xff]
      %v270 = vld [vmem:[%s1 + $0x10] sm:$0xff]
      %v271 = vld [vmem:[%s1 + $0x18] sm:$0xff]
      %v272 = vld [vmem:[%s1 + $0x20] sm:$0xff]
      %v273 = vld [vmem:[%s1 + $0x28] sm:$0xff]
      %v274 = vld [vmem:[%s1 + $0x30] sm:$0xff]
      %v275 = vld [vmem:[%s1 + $0x38] sm:$0xff]
      %v276 = vld [vmem:[%s1 + $0x40] sm:$0xff]
      %v277 = vld [vmem:[%s260 + $0x1] sm:$0xff]
      %v278 = vld [vmem:[%s260 + $0x9] sm:$0xff]
      %s279 = scalar_lea.vmem %s1, 72
      %v280 = vld [vmem:[%s279] sm:$0xff]
      %v281 = vld [vmem:[%s279 + $0x8] sm:$0xff]
      %v282 = vld [vmem:[%s279 + $0x10] sm:$0xff]
      %v283 = vld [vmem:[%s279 + $0x18] sm:$0xff]
      %v284 = vld [vmem:[%s279 + $0x20] sm:$0xff]
      %v285 = vld [vmem:[%s279 + $0x28] sm:$0xff]
      %v286 = vld [vmem:[%s279 + $0x30] sm:$0xff]
      %v287 = vld [vmem:[%s279 + $0x38] sm:$0xff]
      %v288 = vld [vmem:[%s279 + $0x40] sm:$0xff]
      %vm289 = vcmask 588800
      %v291 = vsel %vm289, %v277, 0
      %v294 = vsel %vm289, %v278, 0
      %296 = vmatprep.subr.mxu0 0.0
      %297 = vmatpush1.msra.mxu0 %v280
      %298 = vmatprep.subr.mxu0 0.0
      %299 = vmatpush1.msra.mxu0 %v281
      %300 = vmatprep.subr.mxu0 0.0
      %301 = vmatpush1.msra.mxu0 %v282
      %302 = vmatprep.subr.mxu0 0.0
      %303 = vmatpush1.msra.mxu0 %v283
      %304 = vmatprep.subr.mxu0 0.0
      %305 = vmatpush1.msra.mxu0 %v284
      %306 = vmatprep.subr.mxu0 0.0
      %307 = vmatpush1.msra.mxu0 %v285
      %308 = vmatprep.subr.mxu0 0.0
      %309 = vmatpush1.msra.mxu0 %v286
      %310 = vmatprep.subr.mxu0 0.0
      %311 = vmatpush1.msra.mxu0 %v287
      %312 = vmatprep.subr.mxu0 0.0
      %313 = vmatpush1.msra.mxu0 %v288
      %314 = vmatprep.subr.mxu0 0.0
      %315 = vmatpush1.msra.mxu0 0.0
      %316 = vmatprep.subr.mxu0 0.0
      %317 = vmatpush1.msra.mxu0 0.0
      %318 = vmatprep.subr.mxu0 0.0
      %319 = vmatpush1.msra.mxu0 0.0
      %320 = vmatprep.subr.mxu0 0.0
      %321 = vmatpush1.msra.mxu0 0.0
      %322 = vmatprep.subr.mxu0 0.0
      %323 = vmatpush1.msra.mxu0 0.0
      %324 = vmatprep.subr.mxu0 0.0
      %325 = vmatpush1.msra.mxu0 0.0
      %326 = vmatprep.subr.mxu0 0.0
      %327 = vmatpush1.msra.mxu0 0.0
      %328 = vmatprep.subr.mxu0 0.0
      %329 = vmatpush1.msra.mxu0 0.0
      %330 = vmatprep.subr.mxu0 0.0
      %331 = vmatpush1.msra.mxu0 0.0
      %332 = vmatprep.subr.mxu0 0.0
      %333 = vmatpush1.msra.mxu0 0.0
      %334 = vmatprep.subr.mxu0 0.0
      %335 = vmatpush1.msra.mxu0 0.0
      %336 = vmatprep.subr.mxu0 0.0
      %337 = vmatpush1.msra.mxu0 0.0
      %338 = vmatprep.subr.mxu0 0.0
      %339 = vmatpush1.msra.mxu0 0.0
      %340 = vmatprep.subr.mxu0 0.0
      %341 = vmatpush1.msra.mxu0 0.0
      %342 = vmatprep.subr.mxu0 0.0
      %343 = vmatpush1.msra.mxu0 0.0
      %344 = vmatprep.subr.mxu0 0.0
      %345 = vmatpush1.msra.mxu0 0.0
      %346 = vmatprep.subr.mxu0 0.0
      %347 = vmatpush1.msra.mxu0 0.0
      %348 = vmatprep.subr.mxu0 0.0
      %349 = vmatpush1.msra.mxu0 0.0
      %350 = vmatprep.subr.mxu0 0.0
      %351 = vmatpush1.msra.mxu0 0.0
      %352 = vmatprep.subr.mxu0 0.0
      %353 = vmatpush1.msra.mxu0 0.0
      %354 = vmatprep.subr.mxu0 0.0
      %355 = vmatpush1.msra.mxu0 0.0
      %356 = vmatprep.subr.mxu0 0.0
      %357 = vmatpush1.msra.mxu0 0.0
      %358 = vmatprep.subr.mxu0 0.0
      %359 = vmatpush1.msra.mxu0 0.0
      %360 = vmatprep.mubr.f32.mxu0 0.0
      %361 = vmatmul.mubr.f32.gmra.mrb[0].mxu0 %v291
      %v362 = vpop.f32.mrb[0].mxu0
      %v363 = vadd.f32 0.0, %v362
      %v364 = vpop.f32.mrb[0].mxu0
      %365 = vmatprep.mubr.f32.mxu0 0.0
      %366 = vmatmul.mubr.f32.gmra.mrb[0].mxu0 %v294
      %v367 = vpop.f32.mrb[0].mxu0
      %v368 = vadd.f32 0.0, %v367
      %v369 = vpop.f32.mrb[0].mxu0
      %370 = vdwg.mxu0
      %v372 = vsel %vm289, %v266, 0
      %v375 = vsel %vm289, %v267, 0
      %377 = vmatprep.subr.mxu0 0.0
      %378 = vmatpush1.msra.mxu0 %v268
      %379 = vmatprep.subr.mxu0 0.0
      %380 = vmatpush1.msra.mxu0 %v269
      %381 = vmatprep.subr.mxu0 0.0
      %382 = vmatpush1.msra.mxu0 %v270
      %383 = vmatprep.subr.mxu0 0.0
      %384 = vmatpush1.msra.mxu0 %v271
      %385 = vmatprep.subr.mxu0 0.0
      %386 = vmatpush1.msra.mxu0 %v272
      %387 = vmatprep.subr.mxu0 0.0
      %388 = vmatpush1.msra.mxu0 %v273
      %389 = vmatprep.subr.mxu0 0.0
      %390 = vmatpush1.msra.mxu0 %v274
      %391 = vmatprep.subr.mxu0 0.0
      %392 = vmatpush1.msra.mxu0 %v275
      %393 = vmatprep.subr.mxu0 0.0
      %394 = vmatpush1.msra.mxu0 %v276
      %395 = vmatprep.subr.mxu0 0.0
      %396 = vmatpush1.msra.mxu0 0.0
      %397 = vmatprep.subr.mxu0 0.0
      %398 = vmatpush1.msra.mxu0 0.0
      %399 = vmatprep.subr.mxu0 0.0
      %400 = vmatpush1.msra.mxu0 0.0
      %401 = vmatprep.subr.mxu0 0.0
      %402 = vmatpush1.msra.mxu0 0.0
      %403 = vmatprep.subr.mxu0 0.0
      %404 = vmatpush1.msra.mxu0 0.0
      %405 = vmatprep.subr.mxu0 0.0
      %406 = vmatpush1.msra.mxu0 0.0
      %407 = vmatprep.subr.mxu0 0.0
      %408 = vmatpush1.msra.mxu0 0.0
      %409 = vmatprep.subr.mxu0 0.0
      %410 = vmatpush1.msra.mxu0 0.0
      %411 = vmatprep.subr.mxu0 0.0
      %412 = vmatpush1.msra.mxu0 0.0
      %413 = vmatprep.subr.mxu0 0.0
      %414 = vmatpush1.msra.mxu0 0.0
      %415 = vmatprep.subr.mxu0 0.0
      %416 = vmatpush1.msra.mxu0 0.0
      %417 = vmatprep.subr.mxu0 0.0
      %418 = vmatpush1.msra.mxu0 0.0
      %419 = vmatprep.subr.mxu0 0.0
      %420 = vmatpush1.msra.mxu0 0.0
      %421 = vmatprep.subr.mxu0 0.0
      %422 = vmatpush1.msra.mxu0 0.0
      %423 = vmatprep.subr.mxu0 0.0
      %424 = vmatpush1.msra.mxu0 0.0
      %425 = vmatprep.subr.mxu0 0.0
      %426 = vmatpush1.msra.mxu0 0.0
      %427 = vmatprep.subr.mxu0 0.0
      %428 = vmatpush1.msra.mxu0 0.0
      %429 = vmatprep.subr.mxu0 0.0
      %430 = vmatpush1.msra.mxu0 0.0
      %431 = vmatprep.subr.mxu0 0.0
      %432 = vmatpush1.msra.mxu0 0.0
      %433 = vmatprep.subr.mxu0 0.0
      %434 = vmatpush1.msra.mxu0 0.0
      %435 = vmatprep.subr.mxu0 0.0
      %436 = vmatpush1.msra.mxu0 0.0
      %437 = vmatprep.subr.mxu0 0.0
      %438 = vmatpush1.msra.mxu0 0.0
      %439 = vmatprep.subr.mxu0 0.0
      %440 = vmatpush1.msra.mxu0 0.0
      %441 = vmatprep.mubr.f32.mxu0 0.0
      %442 = vmatmul.mubr.f32.gmra.mrb[0].mxu0 %v372
      %v443 = vpop.f32.mrb[0].mxu0
      %v444 = vadd.f32 %v363, %v443
      %v445 = vpop.f32.mrb[0].mxu0
      %446 = vmatprep.mubr.f32.mxu0 0.0
      %447 = vmatmul.mubr.f32.gmra.mrb[0].mxu0 %v375
      %v448 = vpop.f32.mrb[0].mxu0
      %v449 = vadd.f32 %v368, %v448
      %v450 = vpop.f32.mrb[0].mxu0
      %451 = vdwg.mxu0
      %v452 = vld [vmem:[%s260 + $0x2] sm:$0xff]
      %v453 = vld [vmem:[%s260 + $0xa] sm:$0xff]
      %s454 = scalar_lea.vmem %s1, 144
      %v455 = vld [vmem:[%s454] sm:$0xff]
      %v456 = vld [vmem:[%s454 + $0x8] sm:$0xff]
      %v457 = vld [vmem:[%s454 + $0x10] sm:$0xff]
      %v458 = vld [vmem:[%s454 + $0x18] sm:$0xff]
      %v459 = vld [vmem:[%s454 + $0x20] sm:$0xff]
      %v460 = vld [vmem:[%s454 + $0x28] sm:$0xff]
      %v461 = vld [vmem:[%s454 + $0x30] sm:$0xff]
      %v462 = vld [vmem:[%s454 + $0x38] sm:$0xff]
      %v463 = vld [vmem:[%s454 + $0x40] sm:$0xff]
      %v465 = vsel %vm289, %v452, 0
      %v468 = vsel %vm289, %v453, 0
      %470 = vmatprep.subr.mxu0 0.0
      %471 = vmatpush1.msra.mxu0 %v455
      %472 = vmatprep.subr.mxu0 0.0
      %473 = vmatpush1.msra.mxu0 %v456
      %474 = vmatprep.subr.mxu0 0.0
      %475 = vmatpush1.msra.mxu0 %v457
      %476 = vmatprep.subr.mxu0 0.0
      %477 = vmatpush1.msra.mxu0 %v458
      %478 = vmatprep.subr.mxu0 0.0
      %479 = vmatpush1.msra.mxu0 %v459
      %480 = vmatprep.subr.mxu0 0.0
      %481 = vmatpush1.msra.mxu0 %v460
      %482 = vmatprep.subr.mxu0 0.0
      %483 = vmatpush1.msra.mxu0 %v461
      %484 = vmatprep.subr.mxu0 0.0
      %485 = vmatpush1.msra.mxu0 %v462
      %486 = vmatprep.subr.mxu0 0.0
      %487 = vmatpush1.msra.mxu0 %v463
      %488 = vmatprep.subr.mxu0 0.0
      %489 = vmatpush1.msra.mxu0 0.0
      %490 = vmatprep.subr.mxu0 0.0
      %491 = vmatpush1.msra.mxu0 0.0
      %492 = vmatprep.subr.mxu0 0.0
      %493 = vmatpush1.msra.mxu0 0.0
      %494 = vmatprep.subr.mxu0 0.0
      %495 = vmatpush1.msra.mxu0 0.0
      %496 = vmatprep.subr.mxu0 0.0
      %497 = vmatpush1.msra.mxu0 0.0
      %498 = vmatprep.subr.mxu0 0.0
      %499 = vmatpush1.msra.mxu0 0.0
      %500 = vmatprep.subr.mxu0 0.0
      %501 = vmatpush1.msra.mxu0 0.0
      %502 = vmatprep.subr.mxu0 0.0
      %503 = vmatpush1.msra.mxu0 0.0
      %504 = vmatprep.subr.mxu0 0.0
      %505 = vmatpush1.msra.mxu0 0.0
      %506 = vmatprep.subr.mxu0 0.0
      %507 = vmatpush1.msra.mxu0 0.0
      %508 = vmatprep.subr.mxu0 0.0
      %509 = vmatpush1.msra.mxu0 0.0
      %510 = vmatprep.subr.mxu0 0.0
      %511 = vmatpush1.msra.mxu0 0.0
      %512 = vmatprep.subr.mxu0 0.0
      %513 = vmatpush1.msra.mxu0 0.0
      %514 = vmatprep.subr.mxu0 0.0
      %515 = vmatpush1.msra.mxu0 0.0
      %516 = vmatprep.subr.mxu0 0.0
      %517 = vmatpush1.msra.mxu0 0.0
      %518 = vmatprep.subr.mxu0 0.0
      %519 = vmatpush1.msra.mxu0 0.0
      %520 = vmatprep.subr.mxu0 0.0
      %521 = vmatpush1.msra.mxu0 0.0
      %522 = vmatprep.subr.mxu0 0.0
      %523 = vmatpush1.msra.mxu0 0.0
      %524 = vmatprep.subr.mxu0 0.0
      %525 = vmatpush1.msra.mxu0 0.0
      %526 = vmatprep.subr.mxu0 0.0
      %527 = vmatpush1.msra.mxu0 0.0
      %528 = vmatprep.subr.mxu0 0.0
      %529 = vmatpush1.msra.mxu0 0.0
      %530 = vmatprep.subr.mxu0 0.0
      %531 = vmatpush1.msra.mxu0 0.0
      %532 = vmatprep.subr.mxu0 0.0
      %533 = vmatpush1.msra.mxu0 0.0
      %534 = vmatprep.mubr.f32.mxu0 0.0
      %535 = vmatmul.mubr.f32.gmra.mrb[0].mxu0 %v465
      %v536 = vpop.f32.mrb[0].mxu0
      %v537 = vadd.f32 0.0, %v536
      %v538 = vpop.f32.mrb[0].mxu0
      %539 = vmatprep.mubr.f32.mxu0 0.0
      %540 = vmatmul.mubr.f32.gmra.mrb[0].mxu0 %v468
      %v541 = vpop.f32.mrb[0].mxu0
      %v542 = vadd.f32 0.0, %v541
      %v543 = vpop.f32.mrb[0].mxu0
      %544 = vdwg.mxu0
      %v545 = vadd.f32 %v444, %v537
      %v546 = vadd.f32 %v449, %v542
      %p547 = scmp.eq.s32.totalorder %s23, 0
      %p548 = scmp.eq.s32.totalorder %s24, 0
      %p549 = pnand %p547, %p548
      %p550 = pneg %p549
      // Predicated region
      $region45: #{end_deconv_pallas.1} parent=43 // pred_check
        _
      $region46: #{end_deconv_pallas.1} parent=43 // pred_check_branch
        %552 = sbr.rel (%p549) target = $region48
      $region47: #{end_deconv_pallas.1} parent=43 // pred_region
        %553 = vst [vmem:[#allocation2] sm:$0x1] 0.0
        %554 = vst [vmem:[#allocation3] sm:$0x1] 0.0
      $region48: #{end_deconv_pallas.1} parent=43 // pred_fallthru
        _
      // Predicated region
      $region49: #{end_deconv_pallas.1} parent=43 // pred_check
        %p555 = pneg %p547
      $region50: #{end_deconv_pallas.1} parent=43 // pred_check_branch
        %557 = sbr.rel (%p555) target = $region52
      $region51: #{end_deconv_pallas.1} parent=43 // pred_region
        %v558 = vld [vmem:[#allocation2] sm:$0x1]
        %v559 = vadd.f32 %v545, %v546
        %v560 = vrot.slane %v559, 4
        %v561 = vadd.f32 %v559, %v560
        %v562 = vrot.slane %v561, 2
        %v563 = vadd.f32 %v561, %v562
        %v564 = vrot.slane %v563, 1
        %v565 = vadd.f32 %v563, %v564
        %v566 = vadd.f32 %v558, %v565
        %567 = vst [vmem:[#allocation2] sm:$0x1] %v566
        %v568 = vld [vmem:[#allocation3] sm:$0x1]
        %v569 = vmul.f32 %v545, %v545
        %v570 = vmul.f32 %v546, %v546
        %v571 = vadd.f32 %v569, %v570
        %v572 = vrot.slane %v571, 4
        %v573 = vadd.f32 %v571, %v572
        %v574 = vrot.slane %v573, 2
        %v575 = vadd.f32 %v573, %v574
        %v576 = vrot.slane %v575, 1
        %v577 = vadd.f32 %v575, %v576
        %v578 = vadd.f32 %v568, %v577
        %579 = vst [vmem:[#allocation3] sm:$0x1] %v578
        %580 = vst [vmem:[%s265] sm:$0xff] %v545
        %581 = vst [vmem:[%s265 + $0x8] sm:$0xff] %v546
      $region52: #{end_deconv_pallas.1} parent=43 // pred_fallthru
        _
      %p582 = scmp.eq.s32.totalorder %s23, 1
      // Predicated region
      $region53: #{end_deconv_pallas.1} parent=43 // pred_check
        %p583 = pneg %p582
      $region54: #{end_deconv_pallas.1} parent=43 // pred_check_branch
        %585 = sbr.rel (%p583) target = $region56
      $region55: #{end_deconv_pallas.1} parent=43 // pred_region
        %v586 = vld [vmem:[#allocation2] sm:$0x1]
        %v587 = vld [vmem:[%s2] sm:$0xff]
        %v588 = vld [vmem:[%s2 + $0x8] sm:$0xff]
        %v589 = vld [vmem:[%s2 + $0x10] sm:$0xff]
        %v590 = vld [vmem:[%s2 + $0x18] sm:$0xff]
        %v591 = vld [vmem:[%s2 + $0x20] sm:$0xff]
        %v592 = vld [vmem:[%s2 + $0x28] sm:$0xff]
        %v593 = vld [vmem:[%s2 + $0x30] sm:$0xff]
        %v594 = vld [vmem:[%s2 + $0x38] sm:$0xff]
        %v595 = vld [vmem:[%s2 + $0x40] sm:$0xff]
        %v596 = vld [vmem:[%s2 + $0x48] sm:$0xff]
        %v597 = vld [vmem:[%s2 + $0x50] sm:$0xff]
        %v598 = vld [vmem:[%s2 + $0x58] sm:$0xff]
        %v599 = vld [vmem:[%s2 + $0x60] sm:$0xff]
        %v600 = vld [vmem:[%s2 + $0x68] sm:$0xff]
        %v601 = vld [vmem:[%s2 + $0x70] sm:$0xff]
        %v602 = vld [vmem:[%s2 + $0x78] sm:$0xff]
        %603 = vmatprep.subr.mxu0 0.0
        %604 = vmatpush1.msra.mxu0 %v587
        %605 = vmatprep.subr.mxu0 0.0
        %606 = vmatpush1.msra.mxu0 %v588
        %607 = vmatprep.subr.mxu0 0.0
        %608 = vmatpush1.msra.mxu0 %v589
        %609 = vmatprep.subr.mxu0 0.0
        %610 = vmatpush1.msra.mxu0 %v590
        %611 = vmatprep.subr.mxu0 0.0
        %612 = vmatpush1.msra.mxu0 %v591
        %613 = vmatprep.subr.mxu0 0.0
        %614 = vmatpush1.msra.mxu0 %v592
        %615 = vmatprep.subr.mxu0 0.0
        %616 = vmatpush1.msra.mxu0 %v593
        %617 = vmatprep.subr.mxu0 0.0
        %618 = vmatpush1.msra.mxu0 %v594
        %619 = vmatprep.subr.mxu0 0.0
        %620 = vmatpush1.msra.mxu0 %v595
        %621 = vmatprep.subr.mxu0 0.0
        %622 = vmatpush1.msra.mxu0 %v596
        %623 = vmatprep.subr.mxu0 0.0
        %624 = vmatpush1.msra.mxu0 %v597
        %625 = vmatprep.subr.mxu0 0.0
        %626 = vmatpush1.msra.mxu0 %v598
        %627 = vmatprep.subr.mxu0 0.0
        %628 = vmatpush1.msra.mxu0 %v599
        %629 = vmatprep.subr.mxu0 0.0
        %630 = vmatpush1.msra.mxu0 %v600
        %631 = vmatprep.subr.mxu0 0.0
        %632 = vmatpush1.msra.mxu0 %v601
        %633 = vmatprep.subr.mxu0 0.0
        %634 = vmatpush1.msra.mxu0 %v602
        %635 = vmatprep.subr.mxu0 0.0
        %636 = vmatpush1.msra.mxu0 0.0
        %637 = vmatprep.subr.mxu0 0.0
        %638 = vmatpush1.msra.mxu0 0.0
        %639 = vmatprep.subr.mxu0 0.0
        %640 = vmatpush1.msra.mxu0 0.0
        %641 = vmatprep.subr.mxu0 0.0
        %642 = vmatpush1.msra.mxu0 0.0
        %643 = vmatprep.subr.mxu0 0.0
        %644 = vmatpush1.msra.mxu0 0.0
        %645 = vmatprep.subr.mxu0 0.0
        %646 = vmatpush1.msra.mxu0 0.0
        %647 = vmatprep.subr.mxu0 0.0
        %648 = vmatpush1.msra.mxu0 0.0
        %649 = vmatprep.subr.mxu0 0.0
        %650 = vmatpush1.msra.mxu0 0.0
        %651 = vmatprep.subr.mxu0 0.0
        %652 = vmatpush1.msra.mxu0 0.0
        %653 = vmatprep.subr.mxu0 0.0
        %654 = vmatpush1.msra.mxu0 0.0
        %655 = vmatprep.subr.mxu0 0.0
        %656 = vmatpush1.msra.mxu0 0.0
        %657 = vmatprep.subr.mxu0 0.0
        %658 = vmatpush1.msra.mxu0 0.0
        %659 = vmatprep.subr.mxu0 0.0
        %660 = vmatpush1.msra.mxu0 0.0
        %661 = vmatprep.subr.mxu0 0.0
        %662 = vmatpush1.msra.mxu0 0.0
        %663 = vmatprep.subr.mxu0 0.0
        %664 = vmatpush1.msra.mxu0 0.0
        %665 = vmatprep.subr.mxu0 0.0
        %666 = vmatpush1.msra.mxu0 0.0
        %667 = vmatprep.mubr.f32.mxu0 0.0
        %668 = vmatmul.mubr.f32.gmra.mrb[0].mxu0 %v586
        %v669 = vpop.f32.mrb[0].mxu0
        %v670 = vadd.f32 0.0, %v669
        %v671 = vpop.f32.mrb[0].mxu0
        %672 = vdwg.mxu0
        %v673 = vmul.f32 %v670, 0.001953125
        %v674 = vld [vmem:[#allocation3] sm:$0x1]
        %675 = vmatprep.subr.mxu0 0.0
        %676 = vmatpush1.msra.mxu0 %v587
        %677 = vmatprep.subr.mxu0 0.0
        %678 = vmatpush1.msra.mxu0 %v588
        %679 = vmatprep.subr.mxu0 0.0
        %680 = vmatpush1.msra.mxu0 %v589
        %681 = vmatprep.subr.mxu0 0.0
        %682 = vmatpush1.msra.mxu0 %v590
        %683 = vmatprep.subr.mxu0 0.0
        %684 = vmatpush1.msra.mxu0 %v591
        %685 = vmatprep.subr.mxu0 0.0
        %686 = vmatpush1.msra.mxu0 %v592
        %687 = vmatprep.subr.mxu0 0.0
        %688 = vmatpush1.msra.mxu0 %v593
        %689 = vmatprep.subr.mxu0 0.0
        %690 = vmatpush1.msra.mxu0 %v594
        %691 = vmatprep.subr.mxu0 0.0
        %692 = vmatpush1.msra.mxu0 %v595
        %693 = vmatprep.subr.mxu0 0.0
        %694 = vmatpush1.msra.mxu0 %v596
        %695 = vmatprep.subr.mxu0 0.0
        %696 = vmatpush1.msra.mxu0 %v597
        %697 = vmatprep.subr.mxu0 0.0
        %698 = vmatpush1.msra.mxu0 %v598
        %699 = vmatprep.subr.mxu0 0.0
        %700 = vmatpush1.msra.mxu0 %v599
        %701 = vmatprep.subr.mxu0 0.0
        %702 = vmatpush1.msra.mxu0 %v600
        %703 = vmatprep.subr.mxu0 0.0
        %704 = vmatpush1.msra.mxu0 %v601
        %705 = vmatprep.subr.mxu0 0.0
        %706 = vmatpush1.msra.mxu0 %v602
        %707 = vmatprep.subr.mxu0 0.0
        %708 = vmatpush1.msra.mxu0 0.0
        %709 = vmatprep.subr.mxu0 0.0
        %710 = vmatpush1.msra.mxu0 0.0
        %711 = vmatprep.subr.mxu0 0.0
        %712 = vmatpush1.msra.mxu0 0.0
        %713 = vmatprep.subr.mxu0 0.0
        %714 = vmatpush1.msra.mxu0 0.0
        %715 = vmatprep.subr.mxu0 0.0
        %716 = vmatpush1.msra.mxu0 0.0
        %717 = vmatprep.subr.mxu0 0.0
        %718 = vmatpush1.msra.mxu0 0.0
        %719 = vmatprep.subr.mxu0 0.0
        %720 = vmatpush1.msra.mxu0 0.0
        %721 = vmatprep.subr.mxu0 0.0
        %722 = vmatpush1.msra.mxu0 0.0
        %723 = vmatprep.subr.mxu0 0.0
        %724 = vmatpush1.msra.mxu0 0.0
        %725 = vmatprep.subr.mxu0 0.0
        %726 = vmatpush1.msra.mxu0 0.0
        %727 = vmatprep.subr.mxu0 0.0
        %728 = vmatpush1.msra.mxu0 0.0
        %729 = vmatprep.subr.mxu0 0.0
        %730 = vmatpush1.msra.mxu0 0.0
        %731 = vmatprep.subr.mxu0 0.0
        %732 = vmatpush1.msra.mxu0 0.0
        %733 = vmatprep.subr.mxu0 0.0
        %734 = vmatpush1.msra.mxu0 0.0
        %735 = vmatprep.subr.mxu0 0.0
        %736 = vmatpush1.msra.mxu0 0.0
        %737 = vmatprep.subr.mxu0 0.0
        %738 = vmatpush1.msra.mxu0 0.0
        %739 = vmatprep.mubr.f32.mxu0 0.0
        %740 = vmatmul.mubr.f32.gmra.mrb[0].mxu0 %v674
        %v741 = vpop.f32.mrb[0].mxu0
        %v742 = vadd.f32 0.0, %v741
        %v743 = vpop.f32.mrb[0].mxu0
        %744 = vdwg.mxu0
        %v745 = vmul.f32 %v742, 0.001953125
        %v746 = vmul.f32 %v673, %v673
        %v747 = vsub.f32 %v745, %v746
        %v748 = vadd.f32 %v747, 1e-05
        %v749 = vrsqrt.pop %v748
        %v750 = vld [vmem:[%s3] sm:$0x1]
        %v751 = vmul.f32 %v750, %v749
        %v752 = vld [vmem:[%s4] sm:$0x1]
        %v753 = vmul.f32 %v673, %v751
        %v754 = vsub.f32 %v752, %v753
        %v756 = vlaneseq
        %v757 = vshrl.u32 %v756, 7
        %v758 = vsub.s32 0, %v757
        %v759 = vrot.slane %v751, %v758
        %v761 = vmul.f32 %v545, %v759
        %v762 = vmul.f32 %v546, %v759
        %v764 = vlaneseq
        %v765 = vshrl.u32 %v764, 7
        %v766 = vsub.s32 0, %v765
        %v767 = vrot.slane %v754, %v766
        %v769 = vadd.f32 %v761, %v767
        %v770 = vadd.f32 %v762, %v767
        %vm771 = vcmp.gt.f32.partialorder %v769, 0.0
        %vm772 = vcmp.gt.f32.partialorder %v770, 0.0
        %v773 = vld [vmem:[#allocation4] sm:$0x1]
        %v775 = vlaneseq
        %v776 = vshrl.u32 %v775, 7
        %v777 = vsub.s32 0, %v776
        %v778 = vrot.slane %v773, %v777
        %779 = vset.pattern.permute.xlu0 0
        %780 = vperm.xlu0 %779, %v778
        %v781 = vpop.permute.xlu0 %780
        %v783 = vmul.f32 %v769, %v781
        %v784 = vmul.f32 %v770, %v781
        %v785 = vsel %vm771, %v769, %v783
        %v786 = vsel %vm772, %v770, %v784
        %787 = vst [vmem:[%s265] sm:$0xff] %v785
        %788 = vst [vmem:[%s265 + $0x8] sm:$0xff] %v786
      $region56: #{end_deconv_pallas.1} parent=43 // pred_fallthru
        _
      %p789 = scmp.lt.s32.totalorder %s24, 1
      %s790 = scalar_select %p789, %s24, 1
      %s791 = smul.addr %s790, 2
      %s792 = smul.addr %s791, 8
      %s793 = scalar_lea.vmem %s6, %s792
      // Predicated region
      $region57: #{end_deconv_pallas.1} parent=43 // pred_check
        %p794 = pneg %p180
      $region58: #{end_deconv_pallas.1} parent=43 // pred_check_branch
        %796 = sbr.rel (%p794) target = $region60
      $region59: #{end_deconv_pallas.1} parent=43 // pred_region
        _
      $region60: #{end_deconv_pallas.1} parent=43 // pred_fallthru
        _
    $region44: #{end_deconv_pallas.1} parent=5 // pred_fallthru
      _
    %p797 = scmp.le.s32.totalorder 2, %s14
    // Predicated region
    $region61: #{end_deconv_pallas.1} parent=5 // pred_check
      %p798 = pneg %p797
    $region62: #{end_deconv_pallas.1} parent=5 // pred_check_branch
      %800 = sbr.rel (%p798) target = $region64
    $region63: #{end_deconv_pallas.1} parent=5 // pred_region
      %s801 = ssub.s32 %s14, 2
      // Predicated region
      $region65: #{end_deconv_pallas.1} parent=63 // pred_check
        %p802 = pneg %p186
      $region66: #{end_deconv_pallas.1} parent=63 // pred_check_branch
        %804 = sbr.rel (%p802) target = $region68
      $region67: #{end_deconv_pallas.1} parent=63 // pred_region
        %p805 = scmp.lt.s32.totalorder %s26, 1
        %s806 = scalar_select %p805, %s26, 1
        %s807 = smul.addr %s806, 2
        %s808 = smul.addr %s807, 8
        %s809 = scalar_lea.vmem %s6, %s808
      $region68: #{end_deconv_pallas.1} parent=63 // pred_fallthru
        _
    $region64: #{end_deconv_pallas.1} parent=5 // pred_fallthru
      _
  $region6: #{end_deconv_pallas.1} parent=0 // loop_footer
    %s18 = sadd.s32 1, %s14
  $region7: #{end_deconv_pallas.1} parent=0 // loop_footer_branch
    %13 = sbr.rel target = $region3
  $region8: #{end_deconv_pallas.1} parent=0 // loop_exit
    _

</llo_original>
